<compile_context>
chip_gen: v7x
topology: tpu7x:2x2x1
jax: 0.10.0
libtpu: 0.0.40
codegen_flags: <defaults>
</compile_context>

<pallas_src>
import jax
import jax.numpy as jnp
from jax import lax
from jax.experimental import pallas as pl
from jax.experimental.pallas import tpu as pltpu


def _rowwise_kernel(w_ref, x_ref, o_ref, acc_ref):
    # w_ref:   (TH, O, TW)   weights for TH rows, TW-wide contraction slab
    # x_ref:   (B, TH, TW)   batch vectors for those rows (native layout)
    # o_ref:   (TH, B, O)    output tile in dot_general's natural order
    # acc_ref: (TH, B, O)    f32 accumulator (persists across the k axis)
    k = pl.program_id(1)

    @pl.when(k == 0)
    def _init():
        acc_ref[...] = jnp.zeros_like(acc_ref)

    # Contract W; batch over TH.  Natural dot_general output order is
    # (batch TH, lhs-free B, rhs-free O) == the tile layout, so no
    # vxpose/relayout is needed before the store (review item: einsum
    # 'bhw,how->bho' forced a (h,b,o)->(b,h,o) transpose per tile).
    acc_ref[...] += lax.dot_general(
        x_ref[...],
        w_ref[...],
        dimension_numbers=(((2,), (2,)), ((1,), (0,))),
        preferred_element_type=jnp.float32,
    )

    @pl.when(k == pl.num_programs(1) - 1)
    def _store():
        o_ref[...] = acc_ref[...].astype(o_ref.dtype)


def _choose_blocks(B, H, W, O, in_itemsize, out_itemsize, vmem_cap):
    """Largest (block_h, block_w) whose double-buffered working set fits the
    per-generation VMEM budget.  block_h is a multiple of the sublane pack
    (8 f32 / 16 bf16 / 32 fp8-int8) or full H; block_w is a multiple of 128
    lanes or full W; both must divide the corresponding dim."""
    budget = int(0.40 * vmem_cap)  # leave headroom for compiler temporaries

    def working_set(bh, bw):
        w_tile = bh * O * bw * in_itemsize
        x_tile = B * bh * bw * in_itemsize
        o_tile = bh * B * O * out_itemsize
        acc = bh * B * O * 4
        return 2 * (w_tile + x_tile + o_tile) + acc  # double-buffered I/O + acc

    sublane = {4: 8, 2: 16, 1: 32}.get(in_itemsize, 8)
    bh_cands = sorted(
        {c for c in range(sublane, H + 1, sublane) if H % c == 0} | {H},
        reverse=True,
    )
    bw_cands = [W] + [
        c for c in range(128 * (W // 128), 0, -128) if c != W and W % c == 0
    ]

    best = None
    for bw in bw_cands:          # prefer full W (no k loop, lane-dense) first
        for bh in bh_cands:      # then the largest H block that fits
            if working_set(bh, bw) <= budget:
                best = (bh, bw)
                break
        if best is not None:
            break
    if best is None:             # nothing fits: smallest legal tile
        best = (bh_cands[-1], bw_cands[-1])
    bh, bw = best

    # v7x has 2 TensorCores: give the "parallel" H axis >=2 steps when a clean
    # sublane-aligned split exists and the per-step weight tile stays >=1 MiB,
    # so the extra grid step is noise on single-TC chips (v5e/v6e).
    if H // bh == 1:
        smaller = [c for c in bh_cands if c < bh]
        if smaller and smaller[0] * O * bw * in_itemsize >= (1 << 20):
            bh = smaller[0]
    return bh, bw


def rowwise_linear(x, weights, *, block_h=None, block_w=None):
    """x: (B, H, W), weights: (H, O, W) -> (B, H, O, 1) (PyTorch RowWiseLinear)."""
    B, H, W = x.shape
    H2, O, W2 = weights.shape
    assert H == H2 and W == W2, (x.shape, weights.shape)

    out_dtype = jnp.result_type(x.dtype, weights.dtype)
    in_itemsize = max(jnp.dtype(x.dtype).itemsize,
                      jnp.dtype(weights.dtype).itemsize)
    out_itemsize = jnp.dtype(out_dtype).itemsize

    try:
        vmem_cap = pltpu.get_tpu_info().vmem_capacity_bytes
    except Exception:
        vmem_cap = 64 * 2**20  # conservative fallback: v7x per-TC VMEM

    auto_bh, auto_bw = _choose_blocks(
        B, H, W, O, in_itemsize, out_itemsize, vmem_cap)
    block_h = auto_bh if block_h is None else block_h
    block_w = auto_bw if block_w is None else block_w
    assert H % block_h == 0 and W % block_w == 0, (block_h, block_w, H, W)

    nh, nk = H // block_h, W // block_w

    flops = 2 * B * H * O * W
    bytes_accessed = (H * O * W + B * H * W) * in_itemsize + B * H * O * out_itemsize

    out_hbo = pl.pallas_call(
        _rowwise_kernel,
        out_shape=jax.ShapeDtypeStruct((H, B, O), out_dtype),
        grid_spec=pltpu.PrefetchScalarGridSpec(
            num_scalar_prefetch=0,
            grid=(nh, nk),
            in_specs=[
                # weights rows [h*TH:(h+1)*TH], contraction slab k
                pl.BlockSpec((block_h, O, block_w), lambda h, k: (h, 0, k)),
                # x in native (B, H, W) layout — no wrapper transpose
                pl.BlockSpec((B, block_h, block_w), lambda h, k: (0, h, k)),
            ],
            # output block index constant along k -> stays resident over the
            # reduction; written once on the last k.
            out_specs=pl.BlockSpec((block_h, B, O), lambda h, k: (h, 0, 0)),
            scratch_shapes=[pltpu.VMEM((block_h, B, O), jnp.float32)],
        ),
        compiler_params=pltpu.CompilerParams(
            dimension_semantics=("parallel", "arbitrary"),
            vmem_limit_bytes=int(0.75 * vmem_cap),
        ),
        cost_estimate=pl.CostEstimate(
            flops=flops, transcendentals=0, bytes_accessed=bytes_accessed),
    )(weights, x)

    # PyTorch layout (B, H, O, 1).  The transpose touches only the output
    # (B*H*O elements), negligible next to the H*O*W weight stream.
    return jnp.transpose(out_hbo, (1, 0, 2))[..., None]


if __name__ == "__main__":
    # Small shapes consistent with the module's forward.
    B, H, W, O = 2, 8, 32, 16

    key = jax.random.PRNGKey(0)
    kx, kw = jax.random.split(key)
    x = jax.random.normal(kx, (B, H, W), dtype=jnp.float32)
    # Module __init__ uses torch.ones(height, out_width, width); a random init
    # of the same shape makes the correctness check nontrivial.
    weights = jax.random.normal(kw, (H, O, W), dtype=jnp.float32)

    # f32 path — exact vs. reference.
    out = jax.block_until_ready(rowwise_linear(x, weights))
    ref = jnp.einsum("how,bhw->bho", weights, x)[..., None]
    assert out.shape == (B, H, O, 1), out.shape
    assert jnp.allclose(out, ref, atol=1e-5, rtol=1e-5)

    # bf16 (MXU-native, half weight-HBM traffic) path — same kernel, f32
    # accumulation, looser tolerance.
    out_bf16 = jax.block_until_ready(
        rowwise_linear(x.astype(jnp.bfloat16), weights.astype(jnp.bfloat16)))
    assert out_bf16.shape == (B, H, O, 1), out_bf16.shape
    assert jnp.allclose(out_bf16.astype(jnp.float32), ref, atol=0.5, rtol=0.05)

    print("KERNEL_OK")
</pallas_src>

<mosaic_0001>
module attributes {stable_mosaic.version = 11 : i64} {
  func.func @_rowwise_kernel(%arg0: i32, %arg1: i32, %arg2: memref<8x16x32xf32, #tpu.memory_space<vmem>>, %arg3: memref<2x8x32xf32, #tpu.memory_space<vmem>>, %arg4: memref<8x2x16xf32, #tpu.memory_space<vmem>>, %arg5: memref<8x2x16xf32, #tpu.memory_space<vmem>>) attributes {dimension_semantics = [#tpu.dimension_semantics<parallel>, #tpu.dimension_semantics<arbitrary>], iteration_bounds = array<i64: 1, 1>, scalar_prefetch = 0 : i64, scratch_operands = 1 : i64, tpu.core_type = #tpu.core_type<tc>, window_params = [{transform_indices = @transform_0, window_bounds = array<i64: 8, 16, 32>}, {transform_indices = @transform_1, window_bounds = array<i64: 2, 8, 32>}, {transform_indices = @transform_2, window_bounds = array<i64: 8, 2, 16>}]} {
    %c0_i32 = arith.constant 0 : i32
    %0 = arith.cmpi eq, %arg1, %c0_i32 : i32
    %1 = arith.extui %0 : i1 to i32
    %c0_i32_0 = arith.constant 0 : i32
    %2 = arith.cmpi ne, %1, %c0_i32_0 : i32
    scf.if %2 {
      %cst_14 = arith.constant 0.000000e+00 : f32
      %12 = vector.broadcast %cst_14 : f32 to vector<8x2x16xf32>
      %c0_15 = arith.constant 0 : index
      %c0_16 = arith.constant 0 : index
      %c0_17 = arith.constant 0 : index
      %13 = vector.load %arg5[%c0_15, %c0_16, %c0_17] : memref<8x2x16xf32, #tpu.memory_space<vmem>>, vector<8x2x16xf32>
      tpu.vector_store %arg5[%c0_15, %c0_16, %c0_17], %12 {strides = array<i32>} : memref<8x2x16xf32, #tpu.memory_space<vmem>>, vector<8x2x16xf32>,
    } else {
    }
    %c0 = arith.constant 0 : index
    %c0_1 = arith.constant 0 : index
    %c0_2 = arith.constant 0 : index
    %3 = vector.load %arg5[%c0, %c0_1, %c0_2] : memref<8x2x16xf32, #tpu.memory_space<vmem>>, vector<8x2x16xf32>
    %c0_3 = arith.constant 0 : index
    %c0_4 = arith.constant 0 : index
    %c0_5 = arith.constant 0 : index
    %4 = vector.load %arg3[%c0_3, %c0_4, %c0_5] : memref<2x8x32xf32, #tpu.memory_space<vmem>>, vector<2x8x32xf32>
    %c0_6 = arith.constant 0 : index
    %c0_7 = arith.constant 0 : index
    %c0_8 = arith.constant 0 : index
    %5 = vector.load %arg2[%c0_6, %c0_7, %c0_8] : memref<8x16x32xf32, #tpu.memory_space<vmem>>, vector<8x16x32xf32>
    %cst = arith.constant dense<0.000000e+00> : vector<8x2x16xf32>
    %6 = tpu.matmul %4, %5, %cst {dimension_numbers = #tpu.dot_dimension_numbers<[2], [2], [0], [1], [0, 1, 0, 0, 1, 1], [1], [0]>} : vector<2x8x32xf32>, vector<8x16x32xf32>, vector<8x2x16xf32> -> vector<8x2x16xf32>
    %7 = arith.addf %3, %6 : vector<8x2x16xf32>
    %c0_9 = arith.constant 0 : index
    %c0_10 = arith.constant 0 : index
    %c0_11 = arith.constant 0 : index
    %8 = vector.load %arg5[%c0_9, %c0_10, %c0_11] : memref<8x2x16xf32, #tpu.memory_space<vmem>>, vector<8x2x16xf32>
    tpu.vector_store %arg5[%c0_9, %c0_10, %c0_11], %7 {strides = array<i32>} : memref<8x2x16xf32, #tpu.memory_space<vmem>>, vector<8x2x16xf32>,
    %c0_i32_12 = arith.constant 0 : i32
    %9 = arith.cmpi eq, %arg1, %c0_i32_12 : i32
    %10 = arith.extui %9 : i1 to i32
    %c0_i32_13 = arith.constant 0 : i32
    %11 = arith.cmpi ne, %10, %c0_i32_13 : i32
    scf.if %11 {
      %c0_14 = arith.constant 0 : index
      %c0_15 = arith.constant 0 : index
      %c0_16 = arith.constant 0 : index
      %12 = vector.load %arg5[%c0_14, %c0_15, %c0_16] : memref<8x2x16xf32, #tpu.memory_space<vmem>>, vector<8x2x16xf32>
      %c0_17 = arith.constant 0 : index
      %c0_18 = arith.constant 0 : index
      %c0_19 = arith.constant 0 : index
      %13 = vector.load %arg4[%c0_17, %c0_18, %c0_19] : memref<8x2x16xf32, #tpu.memory_space<vmem>>, vector<8x2x16xf32>
      tpu.vector_store %arg4[%c0_17, %c0_18, %c0_19], %12 {strides = array<i32>} : memref<8x2x16xf32, #tpu.memory_space<vmem>>, vector<8x2x16xf32>,
    } else {
    }
    return
  }
  func.func @transform_0(%arg0: i32, %arg1: i32) -> (i32, i32, i32) {
    %c0_i32 = arith.constant 0 : i32
    %c0_i32_0 = arith.constant 0 : i32
    return %arg0, %c0_i32, %arg1 : i32, i32, i32
  }
  func.func @transform_1(%arg0: i32, %arg1: i32) -> (i32, i32, i32) {
    %c0_i32 = arith.constant 0 : i32
    %c0_i32_0 = arith.constant 0 : i32
    return %c0_i32, %arg0, %arg1 : i32, i32, i32
  }
  func.func @transform_2(%arg0: i32, %arg1: i32) -> (i32, i32, i32) {
    %c0_i32 = arith.constant 0 : i32
    %c0_i32_0 = arith.constant 0 : i32
    %c0_i32_1 = arith.constant 0 : i32
    return %arg0, %c0_i32, %c0_i32_0 : i32, i32, i32
  }
}

</mosaic_0001>

<llo_original>
// kernel: tpu_custom_call.1
$region0: #{tpu_custom_call.1}
  #allocation0 [shape = 'u32[]', space=smem, size = 0x4, offset = 0x4, fixed_abs, tag = 'smem constant byte address 0x4 - core index']
  #allocation1 [shape = 'u32[144,128]{1,0:T(1,128)}', space=vmem, size = 0x12000, scoped, tag = 'internal scratch']
  #allocation2 [shape = 'f32[8,2,16]{2,1,0:T(2,128)}', space=vmem, size = 0x2000, scoped, tag = 'scratch operand']
  %s0 = inlined_call_operand.hbm [shape: f32[8,16,32], index: 0, kind: input, shape index: {}]
  %s1 = inlined_call_operand.hbm [shape: f32[2,8,32], index: 1, kind: input, shape index: {}]
  %s2 = inlined_call_operand.hbm [shape: f32[8,2,16], index: 2, kind: output, shape index: {}]
  %s3 = sld [smem:[#allocation0]]
  $region34: #{tpu_custom_call.1} parent=0
    _
  %s5 = ssub.s32 1, %s3
  %s6 = scalar_select 0, %s5, %s3
  $region1: #{tpu_custom_call.1} parent=0
    #allocation3 [shape = 'u8[65536]{0}', space=vmem, size = 0x10000, scoped, tag = 'input window, operand 0, single buffered']
    #allocation4 [shape = 's32[1]{0}', space=sflag, size = 0x4, scoped, tag = 'scoped memory for tpu_custom_call.1']
    #allocation5 [shape = 's32[1]{0}', space=sflag, size = 0x4, scoped, tag = 'scoped memory for tpu_custom_call.1']
    #allocation6 [shape = 'u8[8192]{0}', space=vmem, size = 0x2000, scoped, tag = 'input window, operand 1, single buffered']
    #allocation7 [shape = 's32[1]{0}', space=sflag, size = 0x4, scoped, tag = 'scoped memory for tpu_custom_call.1']
    #allocation8 [shape = 'u8[8192]{0}', space=vmem, size = 0x2000, scoped, tag = 'output window, operand 0, single buffered']
    %7 = vsyncpa [#allocation4], 0
    %8 = vsyncpa [#allocation7], 0
    %9 = vsyncpa [#allocation5], 0
    // Predicated region
    $region2: #{tpu_custom_call.1} parent=1 // pred_check
      _
    $region3: #{tpu_custom_call.1} parent=1 // pred_check_branch
      %11 = sbr.rel (0) target = $region5
    $region4: #{tpu_custom_call.1} parent=1 // pred_region
      %s13 = ssub.s32 2048, 2048
      %14 = vsyncadd [#allocation4], %s13
      %s15 = sshll.u32 [#allocation3], 4
      %s16 = int_to_ptr.vmem [resolvable:$true] %s15
      %21 = dma.hbm_to_vmem [thread:$0]  %s0, 2048, %s16, [#allocation4], 128, 128, 8
    $region5: #{tpu_custom_call.1} parent=1 // pred_fallthru
      _
    // Predicated region
    $region6: #{tpu_custom_call.1} parent=1 // pred_check
      _
    $region7: #{tpu_custom_call.1} parent=1 // pred_check_branch
      %23 = sbr.rel (0) target = $region9
    $region8: #{tpu_custom_call.1} parent=1 // pred_region
      %s25 = ssub.s32 256, 256
      %26 = vsyncadd [#allocation7], %s25
      %s27 = sshll.u32 [#allocation6], 4
      %s28 = int_to_ptr.vmem [resolvable:$true] %s27
      %33 = dma.hbm_to_vmem [thread:$0]  %s1, 256, %s28, [#allocation7], 128, 128, 8
    $region9: #{tpu_custom_call.1} parent=1 // pred_fallthru
      _
    // Predicated region
    $region10: #{tpu_custom_call.1} parent=1 // pred_check
      _
    $region11: #{tpu_custom_call.1} parent=1 // pred_check_branch
      %35 = sbr.rel (0) target = $region13
    $region12: #{tpu_custom_call.1} parent=1 // pred_region
      %36 = dma.done [#allocation4], 2048
    $region13: #{tpu_custom_call.1} parent=1 // pred_fallthru
      _
    // Predicated region
    $region14: #{tpu_custom_call.1} parent=1 // pred_check
      _
    $region15: #{tpu_custom_call.1} parent=1 // pred_check_branch
      %38 = sbr.rel (0) target = $region17
    $region16: #{tpu_custom_call.1} parent=1 // pred_region
      %39 = dma.done [#allocation7], 256
    $region17: #{tpu_custom_call.1} parent=1 // pred_fallthru
      _
    %p40 = scmp.eq.s32.totalorder 0, 0
    // Predicated region
    $region18: #{tpu_custom_call.1} parent=1 // pred_check
      %p41 = pneg %p40
    $region19: #{tpu_custom_call.1} parent=1 // pred_check_branch
      %43 = sbr.rel (%p41) target = $region21
    $region20: #{tpu_custom_call.1} parent=1 // pred_region
      %vm44 = vcmask 123904
      %45 = vst.msk [vmem:[#allocation2] sm:$0x3] %vm44, 0.0
      %46 = vst.msk [vmem:[#allocation2 + $0x2] sm:$0x3] %vm44, 0.0
      %47 = vst.msk [vmem:[#allocation2 + $0x4] sm:$0x3] %vm44, 0.0
      %48 = vst.msk [vmem:[#allocation2 + $0x6] sm:$0x3] %vm44, 0.0
      %49 = vst.msk [vmem:[#allocation2 + $0x8] sm:$0x3] %vm44, 0.0
      %50 = vst.msk [vmem:[#allocation2 + $0xa] sm:$0x3] %vm44, 0.0
      %51 = vst.msk [vmem:[#allocation2 + $0xc] sm:$0x3] %vm44, 0.0
      %52 = vst.msk [vmem:[#allocation2 + $0xe] sm:$0x3] %vm44, 0.0
    $region21: #{tpu_custom_call.1} parent=1 // pred_fallthru
      _
    %v53 = vld [vmem:[#allocation2] sm:$0x3]
    %v54 = vld [vmem:[#allocation2 + $0x2] sm:$0x3]
    %v55 = vld [vmem:[#allocation2 + $0x4] sm:$0x3]
    %v56 = vld [vmem:[#allocation2 + $0x6] sm:$0x3]
    %v57 = vld [vmem:[#allocation2 + $0x8] sm:$0x3]
    %v58 = vld [vmem:[#allocation2 + $0xa] sm:$0x3]
    %v59 = vld [vmem:[#allocation2 + $0xc] sm:$0x3]
    %v60 = vld [vmem:[#allocation2 + $0xe] sm:$0x3]
    %v61 = vld [vmem:[#allocation6] sm:$0xff]
    %v62 = vld [vmem:[#allocation6 + $0x8] sm:$0xff]
    %v63 = vld [vmem:[#allocation3] sm:$0xff]
    %v64 = vld [vmem:[#allocation3 + $0x8] sm:$0xff]
    %v65 = vld [vmem:[#allocation3 + $0x10] sm:$0xff]
    %v66 = vld [vmem:[#allocation3 + $0x18] sm:$0xff]
    %v67 = vld [vmem:[#allocation3 + $0x20] sm:$0xff]
    %v68 = vld [vmem:[#allocation3 + $0x28] sm:$0xff]
    %v69 = vld [vmem:[#allocation3 + $0x30] sm:$0xff]
    %v70 = vld [vmem:[#allocation3 + $0x38] sm:$0xff]
    %v71 = vld [vmem:[#allocation3 + $0x40] sm:$0xff]
    %v72 = vld [vmem:[#allocation3 + $0x48] sm:$0xff]
    %v73 = vld [vmem:[#allocation3 + $0x50] sm:$0xff]
    %v74 = vld [vmem:[#allocation3 + $0x58] sm:$0xff]
    %v75 = vld [vmem:[#allocation3 + $0x60] sm:$0xff]
    %v76 = vld [vmem:[#allocation3 + $0x68] sm:$0xff]
    %v77 = vld [vmem:[#allocation3 + $0x70] sm:$0xff]
    %v78 = vld [vmem:[#allocation3 + $0x78] sm:$0xff]
    %v79 = vcombine.high %v61, 0.0
    %v81 = vunpack.c.l.s4 1983009808
    %v82 = vunpack.c.0.s8 %v81
    %v83 = vlaneseq
    %v84 = vshrl.u32 %v83, 7
    %v85 = vsub.s32 %v82, %v84
    %v86 = vrot.slane %v61, %v85
    %v88 = vunpack.c.l.s4 1983009808
    %v89 = vunpack.c.0.s8 %v88
    %v90 = vlaneseq
    %v91 = vshrl.u32 %v90, 7
    %v92 = vsub.s32 %v89, %v91
    %v93 = vrot.slane %v79, %v92
    %v94 = vcombine.high %v62, 0.0
    %v96 = vunpack.c.l.s4 1983009808
    %v97 = vunpack.c.0.s8 %v96
    %v98 = vlaneseq
    %v99 = vshrl.u32 %v98, 7
    %v100 = vsub.s32 %v97, %v99
    %v101 = vrot.slane %v62, %v100
    %v103 = vunpack.c.l.s4 1983009808
    %v104 = vunpack.c.0.s8 %v103
    %v105 = vlaneseq
    %v106 = vshrl.u32 %v105, 7
    %v107 = vsub.s32 %v104, %v106
    %v108 = vrot.slane %v94, %v107
    %v109 = vcombine.low %v86, %v101
    %v110 = vcombine.high %v86, %v101
    %v112 = vunpack.c.l.s4 1934713408
    %v113 = vunpack.c.0.s8 %v112
    %v114 = vlaneseq
    %v115 = vshrl.u32 %v114, 7
    %v116 = vsub.s32 %v113, %v115
    %v117 = vrot.slane %v109, %v116
    %v119 = vunpack.c.l.s4 1934713408
    %v120 = vunpack.c.0.s8 %v119
    %v121 = vlaneseq
    %v122 = vshrl.u32 %v121, 7
    %v123 = vsub.s32 %v120, %v122
    %v124 = vrot.slane %v110, %v123
    %v125 = vcombine.low %v93, %v108
    %v126 = vcombine.high %v93, %v108
    %v128 = vunpack.c.l.s4 1934713408
    %v129 = vunpack.c.0.s8 %v128
    %v130 = vlaneseq
    %v131 = vshrl.u32 %v130, 7
    %v132 = vsub.s32 %v129, %v131
    %v133 = vrot.slane %v125, %v132
    %v135 = vunpack.c.l.s4 1934713408
    %v136 = vunpack.c.0.s8 %v135
    %v137 = vlaneseq
    %v138 = vshrl.u32 %v137, 7
    %v139 = vsub.s32 %v136, %v138
    %v140 = vrot.slane %v126, %v139
    %v141 = vcombine.high %v117, 0.0
    %v142 = vcombine.high %v124, 0.0
    %v143 = vcombine.high %v133, 0.0
    %v144 = vcombine.high %v140, 0.0
    %vm145 = vcmask 261120
    %v147 = vsel %vm145, %v117, 0
    %v150 = vsel %vm145, %v63, 0
    %v153 = vsel %vm145, %v64, 0
    %155 = vmatprep.subr.mxu0 0.0
    %156 = vmatpush1.xpose.msra.mxu0 %v150
    %157 = vmatprep.subr.mxu0 0.0
    %158 = vmatpush1.xpose.msra.mxu0 %v153
    %159 = vmatprep.subr.mxu0 0.0
    %160 = vmatpush1.xpose.msra.mxu0 0.0
    %161 = vmatprep.subr.mxu0 0.0
    %162 = vmatpush1.xpose.msra.mxu0 0.0
    %163 = vmatprep.subr.mxu0 0.0
    %164 = vmatpush1.xpose.msra.mxu0 0.0
    %165 = vmatprep.subr.mxu0 0.0
    %166 = vmatpush1.xpose.msra.mxu0 0.0
    %167 = vmatprep.subr.mxu0 0.0
    %168 = vmatpush1.xpose.msra.mxu0 0.0
    %169 = vmatprep.subr.mxu0 0.0
    %170 = vmatpush1.xpose.msra.mxu0 0.0
    %171 = vmatprep.subr.mxu0 0.0
    %172 = vmatpush1.xpose.msra.mxu0 0.0
    %173 = vmatprep.subr.mxu0 0.0
    %174 = vmatpush1.xpose.msra.mxu0 0.0
    %175 = vmatprep.subr.mxu0 0.0
    %176 = vmatpush1.xpose.msra.mxu0 0.0
    %177 = vmatprep.subr.mxu0 0.0
    %178 = vmatpush1.xpose.msra.mxu0 0.0
    %179 = vmatprep.subr.mxu0 0.0
    %180 = vmatpush1.xpose.msra.mxu0 0.0
    %181 = vmatprep.subr.mxu0 0.0
    %182 = vmatpush1.xpose.msra.mxu0 0.0
    %183 = vmatprep.subr.mxu0 0.0
    %184 = vmatpush1.xpose.msra.mxu0 0.0
    %185 = vmatprep.subr.mxu0 0.0
    %186 = vmatpush1.xpose.msra.mxu0 0.0
    %187 = vmatprep.subr.mxu0 0.0
    %188 = vmatpush1.xpose.msra.mxu0 0.0
    %189 = vmatprep.subr.mxu0 0.0
    %190 = vmatpush1.xpose.msra.mxu0 0.0
    %191 = vmatprep.subr.mxu0 0.0
    %192 = vmatpush1.xpose.msra.mxu0 0.0
    %193 = vmatprep.subr.mxu0 0.0
    %194 = vmatpush1.xpose.msra.mxu0 0.0
    %195 = vmatprep.subr.mxu0 0.0
    %196 = vmatpush1.xpose.msra.mxu0 0.0
    %197 = vmatprep.subr.mxu0 0.0
    %198 = vmatpush1.xpose.msra.mxu0 0.0
    %199 = vmatprep.subr.mxu0 0.0
    %200 = vmatpush1.xpose.msra.mxu0 0.0
    %201 = vmatprep.subr.mxu0 0.0
    %202 = vmatpush1.xpose.msra.mxu0 0.0
    %203 = vmatprep.subr.mxu0 0.0
    %204 = vmatpush1.xpose.msra.mxu0 0.0
    %205 = vmatprep.subr.mxu0 0.0
    %206 = vmatpush1.xpose.msra.mxu0 0.0
    %207 = vmatprep.subr.mxu0 0.0
    %208 = vmatpush1.xpose.msra.mxu0 0.0
    %209 = vmatprep.subr.mxu0 0.0
    %210 = vmatpush1.xpose.msra.mxu0 0.0
    %211 = vmatprep.subr.mxu0 0.0
    %212 = vmatpush1.xpose.msra.mxu0 0.0
    %213 = vmatprep.subr.mxu0 0.0
    %214 = vmatpush1.xpose.msra.mxu0 0.0
    %215 = vmatprep.subr.mxu0 0.0
    %216 = vmatpush1.xpose.msra.mxu0 0.0
    %217 = vmatprep.subr.mxu0 0.0
    %218 = vmatpush1.xpose.msra.mxu0 0.0
    %219 = vmatprep.mubr.f32.mxu0 0.0
    %220 = vmatmul.mubr.f32.gmra.mrb[0].mxu0 %v147
    %v221 = vpop.f32.mrb[0].mxu0
    %v222 = vadd.f32 0.0, %v221
    %v223 = vpop.f32.mrb[0].mxu0
    %224 = vdwg.mxu0
    %v226 = vsel %vm145, %v141, 0
    %v229 = vsel %vm145, %v65, 0
    %v232 = vsel %vm145, %v66, 0
    %234 = vmatprep.subr.mxu0 0.0
    %235 = vmatpush1.xpose.msra.mxu0 %v229
    %236 = vmatprep.subr.mxu0 0.0
    %237 = vmatpush1.xpose.msra.mxu0 %v232
    %238 = vmatprep.subr.mxu0 0.0
    %239 = vmatpush1.xpose.msra.mxu0 0.0
    %240 = vmatprep.subr.mxu0 0.0
    %241 = vmatpush1.xpose.msra.mxu0 0.0
    %242 = vmatprep.subr.mxu0 0.0
    %243 = vmatpush1.xpose.msra.mxu0 0.0
    %244 = vmatprep.subr.mxu0 0.0
    %245 = vmatpush1.xpose.msra.mxu0 0.0
    %246 = vmatprep.subr.mxu0 0.0
    %247 = vmatpush1.xpose.msra.mxu0 0.0
    %248 = vmatprep.subr.mxu0 0.0
    %249 = vmatpush1.xpose.msra.mxu0 0.0
    %250 = vmatprep.subr.mxu0 0.0
    %251 = vmatpush1.xpose.msra.mxu0 0.0
    %252 = vmatprep.subr.mxu0 0.0
    %253 = vmatpush1.xpose.msra.mxu0 0.0
    %254 = vmatprep.subr.mxu0 0.0
    %255 = vmatpush1.xpose.msra.mxu0 0.0
    %256 = vmatprep.subr.mxu0 0.0
    %257 = vmatpush1.xpose.msra.mxu0 0.0
    %258 = vmatprep.subr.mxu0 0.0
    %259 = vmatpush1.xpose.msra.mxu0 0.0
    %260 = vmatprep.subr.mxu0 0.0
    %261 = vmatpush1.xpose.msra.mxu0 0.0
    %262 = vmatprep.subr.mxu0 0.0
    %263 = vmatpush1.xpose.msra.mxu0 0.0
    %264 = vmatprep.subr.mxu0 0.0
    %265 = vmatpush1.xpose.msra.mxu0 0.0
    %266 = vmatprep.subr.mxu0 0.0
    %267 = vmatpush1.xpose.msra.mxu0 0.0
    %268 = vmatprep.subr.mxu0 0.0
    %269 = vmatpush1.xpose.msra.mxu0 0.0
    %270 = vmatprep.subr.mxu0 0.0
    %271 = vmatpush1.xpose.msra.mxu0 0.0
    %272 = vmatprep.subr.mxu0 0.0
    %273 = vmatpush1.xpose.msra.mxu0 0.0
    %274 = vmatprep.subr.mxu0 0.0
    %275 = vmatpush1.xpose.msra.mxu0 0.0
    %276 = vmatprep.subr.mxu0 0.0
    %277 = vmatpush1.xpose.msra.mxu0 0.0
    %278 = vmatprep.subr.mxu0 0.0
    %279 = vmatpush1.xpose.msra.mxu0 0.0
    %280 = vmatprep.subr.mxu0 0.0
    %281 = vmatpush1.xpose.msra.mxu0 0.0
    %282 = vmatprep.subr.mxu0 0.0
    %283 = vmatpush1.xpose.msra.mxu0 0.0
    %284 = vmatprep.subr.mxu0 0.0
    %285 = vmatpush1.xpose.msra.mxu0 0.0
    %286 = vmatprep.subr.mxu0 0.0
    %287 = vmatpush1.xpose.msra.mxu0 0.0
    %288 = vmatprep.subr.mxu0 0.0
    %289 = vmatpush1.xpose.msra.mxu0 0.0
    %290 = vmatprep.subr.mxu0 0.0
    %291 = vmatpush1.xpose.msra.mxu0 0.0
    %292 = vmatprep.subr.mxu0 0.0
    %293 = vmatpush1.xpose.msra.mxu0 0.0
    %294 = vmatprep.subr.mxu0 0.0
    %295 = vmatpush1.xpose.msra.mxu0 0.0
    %296 = vmatprep.subr.mxu0 0.0
    %297 = vmatpush1.xpose.msra.mxu0 0.0
    %298 = vmatprep.mubr.f32.mxu0 0.0
    %299 = vmatmul.mubr.f32.gmra.mrb[0].mxu0 %v226
    %v300 = vpop.f32.mrb[0].mxu0
    %v301 = vadd.f32 0.0, %v300
    %v302 = vpop.f32.mrb[0].mxu0
    %303 = vdwg.mxu0
    %v305 = vsel %vm145, %v124, 0
    %v308 = vsel %vm145, %v67, 0
    %v311 = vsel %vm145, %v68, 0
    %313 = vmatprep.subr.mxu0 0.0
    %314 = vmatpush1.xpose.msra.mxu0 %v308
    %315 = vmatprep.subr.mxu0 0.0
    %316 = vmatpush1.xpose.msra.mxu0 %v311
    %317 = vmatprep.subr.mxu0 0.0
    %318 = vmatpush1.xpose.msra.mxu0 0.0
    %319 = vmatprep.subr.mxu0 0.0
    %320 = vmatpush1.xpose.msra.mxu0 0.0
    %321 = vmatprep.subr.mxu0 0.0
    %322 = vmatpush1.xpose.msra.mxu0 0.0
    %323 = vmatprep.subr.mxu0 0.0
    %324 = vmatpush1.xpose.msra.mxu0 0.0
    %325 = vmatprep.subr.mxu0 0.0
    %326 = vmatpush1.xpose.msra.mxu0 0.0
    %327 = vmatprep.subr.mxu0 0.0
    %328 = vmatpush1.xpose.msra.mxu0 0.0
    %329 = vmatprep.subr.mxu0 0.0
    %330 = vmatpush1.xpose.msra.mxu0 0.0
    %331 = vmatprep.subr.mxu0 0.0
    %332 = vmatpush1.xpose.msra.mxu0 0.0
    %333 = vmatprep.subr.mxu0 0.0
    %334 = vmatpush1.xpose.msra.mxu0 0.0
    %335 = vmatprep.subr.mxu0 0.0
    %336 = vmatpush1.xpose.msra.mxu0 0.0
    %337 = vmatprep.subr.mxu0 0.0
    %338 = vmatpush1.xpose.msra.mxu0 0.0
    %339 = vmatprep.subr.mxu0 0.0
    %340 = vmatpush1.xpose.msra.mxu0 0.0
    %341 = vmatprep.subr.mxu0 0.0
    %342 = vmatpush1.xpose.msra.mxu0 0.0
    %343 = vmatprep.subr.mxu0 0.0
    %344 = vmatpush1.xpose.msra.mxu0 0.0
    %345 = vmatprep.subr.mxu0 0.0
    %346 = vmatpush1.xpose.msra.mxu0 0.0
    %347 = vmatprep.subr.mxu0 0.0
    %348 = vmatpush1.xpose.msra.mxu0 0.0
    %349 = vmatprep.subr.mxu0 0.0
    %350 = vmatpush1.xpose.msra.mxu0 0.0
    %351 = vmatprep.subr.mxu0 0.0
    %352 = vmatpush1.xpose.msra.mxu0 0.0
    %353 = vmatprep.subr.mxu0 0.0
    %354 = vmatpush1.xpose.msra.mxu0 0.0
    %355 = vmatprep.subr.mxu0 0.0
    %356 = vmatpush1.xpose.msra.mxu0 0.0
    %357 = vmatprep.subr.mxu0 0.0
    %358 = vmatpush1.xpose.msra.mxu0 0.0
    %359 = vmatprep.subr.mxu0 0.0
    %360 = vmatpush1.xpose.msra.mxu0 0.0
    %361 = vmatprep.subr.mxu0 0.0
    %362 = vmatpush1.xpose.msra.mxu0 0.0
    %363 = vmatprep.subr.mxu0 0.0
    %364 = vmatpush1.xpose.msra.mxu0 0.0
    %365 = vmatprep.subr.mxu0 0.0
    %366 = vmatpush1.xpose.msra.mxu0 0.0
    %367 = vmatprep.subr.mxu0 0.0
    %368 = vmatpush1.xpose.msra.mxu0 0.0
    %369 = vmatprep.subr.mxu0 0.0
    %370 = vmatpush1.xpose.msra.mxu0 0.0
    %371 = vmatprep.subr.mxu0 0.0
    %372 = vmatpush1.xpose.msra.mxu0 0.0
    %373 = vmatprep.subr.mxu0 0.0
    %374 = vmatpush1.xpose.msra.mxu0 0.0
    %375 = vmatprep.subr.mxu0 0.0
    %376 = vmatpush1.xpose.msra.mxu0 0.0
    %377 = vmatprep.mubr.f32.mxu0 0.0
    %378 = vmatmul.mubr.f32.gmra.mrb[0].mxu0 %v305
    %v379 = vpop.f32.mrb[0].mxu0
    %v380 = vadd.f32 0.0, %v379
    %v381 = vpop.f32.mrb[0].mxu0
    %382 = vdwg.mxu0
    %v384 = vsel %vm145, %v142, 0
    %v387 = vsel %vm145, %v69, 0
    %v390 = vsel %vm145, %v70, 0
    %392 = vmatprep.subr.mxu0 0.0
    %393 = vmatpush1.xpose.msra.mxu0 %v387
    %394 = vmatprep.subr.mxu0 0.0
    %395 = vmatpush1.xpose.msra.mxu0 %v390
    %396 = vmatprep.subr.mxu0 0.0
    %397 = vmatpush1.xpose.msra.mxu0 0.0
    %398 = vmatprep.subr.mxu0 0.0
    %399 = vmatpush1.xpose.msra.mxu0 0.0
    %400 = vmatprep.subr.mxu0 0.0
    %401 = vmatpush1.xpose.msra.mxu0 0.0
    %402 = vmatprep.subr.mxu0 0.0
    %403 = vmatpush1.xpose.msra.mxu0 0.0
    %404 = vmatprep.subr.mxu0 0.0
    %405 = vmatpush1.xpose.msra.mxu0 0.0
    %406 = vmatprep.subr.mxu0 0.0
    %407 = vmatpush1.xpose.msra.mxu0 0.0
    %408 = vmatprep.subr.mxu0 0.0
    %409 = vmatpush1.xpose.msra.mxu0 0.0
    %410 = vmatprep.subr.mxu0 0.0
    %411 = vmatpush1.xpose.msra.mxu0 0.0
    %412 = vmatprep.subr.mxu0 0.0
    %413 = vmatpush1.xpose.msra.mxu0 0.0
    %414 = vmatprep.subr.mxu0 0.0
    %415 = vmatpush1.xpose.msra.mxu0 0.0
    %416 = vmatprep.subr.mxu0 0.0
    %417 = vmatpush1.xpose.msra.mxu0 0.0
    %418 = vmatprep.subr.mxu0 0.0
    %419 = vmatpush1.xpose.msra.mxu0 0.0
    %420 = vmatprep.subr.mxu0 0.0
    %421 = vmatpush1.xpose.msra.mxu0 0.0
    %422 = vmatprep.subr.mxu0 0.0
    %423 = vmatpush1.xpose.msra.mxu0 0.0
    %424 = vmatprep.subr.mxu0 0.0
    %425 = vmatpush1.xpose.msra.mxu0 0.0
    %426 = vmatprep.subr.mxu0 0.0
    %427 = vmatpush1.xpose.msra.mxu0 0.0
    %428 = vmatprep.subr.mxu0 0.0
    %429 = vmatpush1.xpose.msra.mxu0 0.0
    %430 = vmatprep.subr.mxu0 0.0
    %431 = vmatpush1.xpose.msra.mxu0 0.0
    %432 = vmatprep.subr.mxu0 0.0
    %433 = vmatpush1.xpose.msra.mxu0 0.0
    %434 = vmatprep.subr.mxu0 0.0
    %435 = vmatpush1.xpose.msra.mxu0 0.0
    %436 = vmatprep.subr.mxu0 0.0
    %437 = vmatpush1.xpose.msra.mxu0 0.0
    %438 = vmatprep.subr.mxu0 0.0
    %439 = vmatpush1.xpose.msra.mxu0 0.0
    %440 = vmatprep.subr.mxu0 0.0
    %441 = vmatpush1.xpose.msra.mxu0 0.0
    %442 = vmatprep.subr.mxu0 0.0
    %443 = vmatpush1.xpose.msra.mxu0 0.0
    %444 = vmatprep.subr.mxu0 0.0
    %445 = vmatpush1.xpose.msra.mxu0 0.0
    %446 = vmatprep.subr.mxu0 0.0
    %447 = vmatpush1.xpose.msra.mxu0 0.0
    %448 = vmatprep.subr.mxu0 0.0
    %449 = vmatpush1.xpose.msra.mxu0 0.0
    %450 = vmatprep.subr.mxu0 0.0
    %451 = vmatpush1.xpose.msra.mxu0 0.0
    %452 = vmatprep.subr.mxu0 0.0
    %453 = vmatpush1.xpose.msra.mxu0 0.0
    %454 = vmatprep.subr.mxu0 0.0
    %455 = vmatpush1.xpose.msra.mxu0 0.0
    %456 = vmatprep.mubr.f32.mxu0 0.0
    %457 = vmatmul.mubr.f32.gmra.mrb[0].mxu0 %v384
    %v458 = vpop.f32.mrb[0].mxu0
    %v459 = vadd.f32 0.0, %v458
    %v460 = vpop.f32.mrb[0].mxu0
    %461 = vdwg.mxu0
    %v463 = vsel %vm145, %v133, 0
    %v466 = vsel %vm145, %v71, 0
    %v469 = vsel %vm145, %v72, 0
    %471 = vmatprep.subr.mxu0 0.0
    %472 = vmatpush1.xpose.msra.mxu0 %v466
    %473 = vmatprep.subr.mxu0 0.0
    %474 = vmatpush1.xpose.msra.mxu0 %v469
    %475 = vmatprep.subr.mxu0 0.0
    %476 = vmatpush1.xpose.msra.mxu0 0.0
    %477 = vmatprep.subr.mxu0 0.0
    %478 = vmatpush1.xpose.msra.mxu0 0.0
    %479 = vmatprep.subr.mxu0 0.0
    %480 = vmatpush1.xpose.msra.mxu0 0.0
    %481 = vmatprep.subr.mxu0 0.0
    %482 = vmatpush1.xpose.msra.mxu0 0.0
    %483 = vmatprep.subr.mxu0 0.0
    %484 = vmatpush1.xpose.msra.mxu0 0.0
    %485 = vmatprep.subr.mxu0 0.0
    %486 = vmatpush1.xpose.msra.mxu0 0.0
    %487 = vmatprep.subr.mxu0 0.0
    %488 = vmatpush1.xpose.msra.mxu0 0.0
    %489 = vmatprep.subr.mxu0 0.0
    %490 = vmatpush1.xpose.msra.mxu0 0.0
    %491 = vmatprep.subr.mxu0 0.0
    %492 = vmatpush1.xpose.msra.mxu0 0.0
    %493 = vmatprep.subr.mxu0 0.0
    %494 = vmatpush1.xpose.msra.mxu0 0.0
    %495 = vmatprep.subr.mxu0 0.0
    %496 = vmatpush1.xpose.msra.mxu0 0.0
    %497 = vmatprep.subr.mxu0 0.0
    %498 = vmatpush1.xpose.msra.mxu0 0.0
    %499 = vmatprep.subr.mxu0 0.0
    %500 = vmatpush1.xpose.msra.mxu0 0.0
    %501 = vmatprep.subr.mxu0 0.0
    %502 = vmatpush1.xpose.msra.mxu0 0.0
    %503 = vmatprep.subr.mxu0 0.0
    %504 = vmatpush1.xpose.msra.mxu0 0.0
    %505 = vmatprep.subr.mxu0 0.0
    %506 = vmatpush1.xpose.msra.mxu0 0.0
    %507 = vmatprep.subr.mxu0 0.0
    %508 = vmatpush1.xpose.msra.mxu0 0.0
    %509 = vmatprep.subr.mxu0 0.0
    %510 = vmatpush1.xpose.msra.mxu0 0.0
    %511 = vmatprep.subr.mxu0 0.0
    %512 = vmatpush1.xpose.msra.mxu0 0.0
    %513 = vmatprep.subr.mxu0 0.0
    %514 = vmatpush1.xpose.msra.mxu0 0.0
    %515 = vmatprep.subr.mxu0 0.0
    %516 = vmatpush1.xpose.msra.mxu0 0.0
    %517 = vmatprep.subr.mxu0 0.0
    %518 = vmatpush1.xpose.msra.mxu0 0.0
    %519 = vmatprep.subr.mxu0 0.0
    %520 = vmatpush1.xpose.msra.mxu0 0.0
    %521 = vmatprep.subr.mxu0 0.0
    %522 = vmatpush1.xpose.msra.mxu0 0.0
    %523 = vmatprep.subr.mxu0 0.0
    %524 = vmatpush1.xpose.msra.mxu0 0.0
    %525 = vmatprep.subr.mxu0 0.0
    %526 = vmatpush1.xpose.msra.mxu0 0.0
    %527 = vmatprep.subr.mxu0 0.0
    %528 = vmatpush1.xpose.msra.mxu0 0.0
    %529 = vmatprep.subr.mxu0 0.0
    %530 = vmatpush1.xpose.msra.mxu0 0.0
    %531 = vmatprep.subr.mxu0 0.0
    %532 = vmatpush1.xpose.msra.mxu0 0.0
    %533 = vmatprep.subr.mxu0 0.0
    %534 = vmatpush1.xpose.msra.mxu0 0.0
    %535 = vmatprep.mubr.f32.mxu0 0.0
    %536 = vmatmul.mubr.f32.gmra.mrb[0].mxu0 %v463
    %v537 = vpop.f32.mrb[0].mxu0
    %v538 = vadd.f32 0.0, %v537
    %v539 = vpop.f32.mrb[0].mxu0
    %540 = vdwg.mxu0
    %v542 = vsel %vm145, %v143, 0
    %v545 = vsel %vm145, %v73, 0
    %v548 = vsel %vm145, %v74, 0
    %550 = vmatprep.subr.mxu0 0.0
    %551 = vmatpush1.xpose.msra.mxu0 %v545
    %552 = vmatprep.subr.mxu0 0.0
    %553 = vmatpush1.xpose.msra.mxu0 %v548
    %554 = vmatprep.subr.mxu0 0.0
    %555 = vmatpush1.xpose.msra.mxu0 0.0
    %556 = vmatprep.subr.mxu0 0.0
    %557 = vmatpush1.xpose.msra.mxu0 0.0
    %558 = vmatprep.subr.mxu0 0.0
    %559 = vmatpush1.xpose.msra.mxu0 0.0
    %560 = vmatprep.subr.mxu0 0.0
    %561 = vmatpush1.xpose.msra.mxu0 0.0
    %562 = vmatprep.subr.mxu0 0.0
    %563 = vmatpush1.xpose.msra.mxu0 0.0
    %564 = vmatprep.subr.mxu0 0.0
    %565 = vmatpush1.xpose.msra.mxu0 0.0
    %566 = vmatprep.subr.mxu0 0.0
    %567 = vmatpush1.xpose.msra.mxu0 0.0
    %568 = vmatprep.subr.mxu0 0.0
    %569 = vmatpush1.xpose.msra.mxu0 0.0
    %570 = vmatprep.subr.mxu0 0.0
    %571 = vmatpush1.xpose.msra.mxu0 0.0
    %572 = vmatprep.subr.mxu0 0.0
    %573 = vmatpush1.xpose.msra.mxu0 0.0
    %574 = vmatprep.subr.mxu0 0.0
    %575 = vmatpush1.xpose.msra.mxu0 0.0
    %576 = vmatprep.subr.mxu0 0.0
    %577 = vmatpush1.xpose.msra.mxu0 0.0
    %578 = vmatprep.subr.mxu0 0.0
    %579 = vmatpush1.xpose.msra.mxu0 0.0
    %580 = vmatprep.subr.mxu0 0.0
    %581 = vmatpush1.xpose.msra.mxu0 0.0
    %582 = vmatprep.subr.mxu0 0.0
    %583 = vmatpush1.xpose.msra.mxu0 0.0
    %584 = vmatprep.subr.mxu0 0.0
    %585 = vmatpush1.xpose.msra.mxu0 0.0
    %586 = vmatprep.subr.mxu0 0.0
    %587 = vmatpush1.xpose.msra.mxu0 0.0
    %588 = vmatprep.subr.mxu0 0.0
    %589 = vmatpush1.xpose.msra.mxu0 0.0
    %590 = vmatprep.subr.mxu0 0.0
    %591 = vmatpush1.xpose.msra.mxu0 0.0
    %592 = vmatprep.subr.mxu0 0.0
    %593 = vmatpush1.xpose.msra.mxu0 0.0
    %594 = vmatprep.subr.mxu0 0.0
    %595 = vmatpush1.xpose.msra.mxu0 0.0
    %596 = vmatprep.subr.mxu0 0.0
    %597 = vmatpush1.xpose.msra.mxu0 0.0
    %598 = vmatprep.subr.mxu0 0.0
    %599 = vmatpush1.xpose.msra.mxu0 0.0
    %600 = vmatprep.subr.mxu0 0.0
    %601 = vmatpush1.xpose.msra.mxu0 0.0
    %602 = vmatprep.subr.mxu0 0.0
    %603 = vmatpush1.xpose.msra.mxu0 0.0
    %604 = vmatprep.subr.mxu0 0.0
    %605 = vmatpush1.xpose.msra.mxu0 0.0
    %606 = vmatprep.subr.mxu0 0.0
    %607 = vmatpush1.xpose.msra.mxu0 0.0
    %608 = vmatprep.subr.mxu0 0.0
    %609 = vmatpush1.xpose.msra.mxu0 0.0
    %610 = vmatprep.subr.mxu0 0.0
    %611 = vmatpush1.xpose.msra.mxu0 0.0
    %612 = vmatprep.subr.mxu0 0.0
    %613 = vmatpush1.xpose.msra.mxu0 0.0
    %614 = vmatprep.mubr.f32.mxu0 0.0
    %615 = vmatmul.mubr.f32.gmra.mrb[0].mxu0 %v542
    %v616 = vpop.f32.mrb[0].mxu0
    %v617 = vadd.f32 0.0, %v616
    %v618 = vpop.f32.mrb[0].mxu0
    %619 = vdwg.mxu0
    %v621 = vsel %vm145, %v140, 0
    %v624 = vsel %vm145, %v75, 0
    %v627 = vsel %vm145, %v76, 0
    %629 = vmatprep.subr.mxu0 0.0
    %630 = vmatpush1.xpose.msra.mxu0 %v624
    %631 = vmatprep.subr.mxu0 0.0
    %632 = vmatpush1.xpose.msra.mxu0 %v627
    %633 = vmatprep.subr.mxu0 0.0
    %634 = vmatpush1.xpose.msra.mxu0 0.0
    %635 = vmatprep.subr.mxu0 0.0
    %636 = vmatpush1.xpose.msra.mxu0 0.0
    %637 = vmatprep.subr.mxu0 0.0
    %638 = vmatpush1.xpose.msra.mxu0 0.0
    %639 = vmatprep.subr.mxu0 0.0
    %640 = vmatpush1.xpose.msra.mxu0 0.0
    %641 = vmatprep.subr.mxu0 0.0
    %642 = vmatpush1.xpose.msra.mxu0 0.0
    %643 = vmatprep.subr.mxu0 0.0
    %644 = vmatpush1.xpose.msra.mxu0 0.0
    %645 = vmatprep.subr.mxu0 0.0
    %646 = vmatpush1.xpose.msra.mxu0 0.0
    %647 = vmatprep.subr.mxu0 0.0
    %648 = vmatpush1.xpose.msra.mxu0 0.0
    %649 = vmatprep.subr.mxu0 0.0
    %650 = vmatpush1.xpose.msra.mxu0 0.0
    %651 = vmatprep.subr.mxu0 0.0
    %652 = vmatpush1.xpose.msra.mxu0 0.0
    %653 = vmatprep.subr.mxu0 0.0
    %654 = vmatpush1.xpose.msra.mxu0 0.0
    %655 = vmatprep.subr.mxu0 0.0
    %656 = vmatpush1.xpose.msra.mxu0 0.0
    %657 = vmatprep.subr.mxu0 0.0
    %658 = vmatpush1.xpose.msra.mxu0 0.0
    %659 = vmatprep.subr.mxu0 0.0
    %660 = vmatpush1.xpose.msra.mxu0 0.0
    %661 = vmatprep.subr.mxu0 0.0
    %662 = vmatpush1.xpose.msra.mxu0 0.0
    %663 = vmatprep.subr.mxu0 0.0
    %664 = vmatpush1.xpose.msra.mxu0 0.0
    %665 = vmatprep.subr.mxu0 0.0
    %666 = vmatpush1.xpose.msra.mxu0 0.0
    %667 = vmatprep.subr.mxu0 0.0
    %668 = vmatpush1.xpose.msra.mxu0 0.0
    %669 = vmatprep.subr.mxu0 0.0
    %670 = vmatpush1.xpose.msra.mxu0 0.0
    %671 = vmatprep.subr.mxu0 0.0
    %672 = vmatpush1.xpose.msra.mxu0 0.0
    %673 = vmatprep.subr.mxu0 0.0
    %674 = vmatpush1.xpose.msra.mxu0 0.0
    %675 = vmatprep.subr.mxu0 0.0
    %676 = vmatpush1.xpose.msra.mxu0 0.0
    %677 = vmatprep.subr.mxu0 0.0
    %678 = vmatpush1.xpose.msra.mxu0 0.0
    %679 = vmatprep.subr.mxu0 0.0
    %680 = vmatpush1.xpose.msra.mxu0 0.0
    %681 = vmatprep.subr.mxu0 0.0
    %682 = vmatpush1.xpose.msra.mxu0 0.0
    %683 = vmatprep.subr.mxu0 0.0
    %684 = vmatpush1.xpose.msra.mxu0 0.0
    %685 = vmatprep.subr.mxu0 0.0
    %686 = vmatpush1.xpose.msra.mxu0 0.0
    %687 = vmatprep.subr.mxu0 0.0
    %688 = vmatpush1.xpose.msra.mxu0 0.0
    %689 = vmatprep.subr.mxu0 0.0
    %690 = vmatpush1.xpose.msra.mxu0 0.0
    %691 = vmatprep.subr.mxu0 0.0
    %692 = vmatpush1.xpose.msra.mxu0 0.0
    %693 = vmatprep.mubr.f32.mxu0 0.0
    %694 = vmatmul.mubr.f32.gmra.mrb[0].mxu0 %v621
    %v695 = vpop.f32.mrb[0].mxu0
    %v696 = vadd.f32 0.0, %v695
    %v697 = vpop.f32.mrb[0].mxu0
    %698 = vdwg.mxu0
    %v700 = vsel %vm145, %v144, 0
    %v703 = vsel %vm145, %v77, 0
    %v706 = vsel %vm145, %v78, 0
    %708 = vmatprep.subr.mxu0 0.0
    %709 = vmatpush1.xpose.msra.mxu0 %v703
    %710 = vmatprep.subr.mxu0 0.0
    %711 = vmatpush1.xpose.msra.mxu0 %v706
    %712 = vmatprep.subr.mxu0 0.0
    %713 = vmatpush1.xpose.msra.mxu0 0.0
    %714 = vmatprep.subr.mxu0 0.0
    %715 = vmatpush1.xpose.msra.mxu0 0.0
    %716 = vmatprep.subr.mxu0 0.0
    %717 = vmatpush1.xpose.msra.mxu0 0.0
    %718 = vmatprep.subr.mxu0 0.0
    %719 = vmatpush1.xpose.msra.mxu0 0.0
    %720 = vmatprep.subr.mxu0 0.0
    %721 = vmatpush1.xpose.msra.mxu0 0.0
    %722 = vmatprep.subr.mxu0 0.0
    %723 = vmatpush1.xpose.msra.mxu0 0.0
    %724 = vmatprep.subr.mxu0 0.0
    %725 = vmatpush1.xpose.msra.mxu0 0.0
    %726 = vmatprep.subr.mxu0 0.0
    %727 = vmatpush1.xpose.msra.mxu0 0.0
    %728 = vmatprep.subr.mxu0 0.0
    %729 = vmatpush1.xpose.msra.mxu0 0.0
    %730 = vmatprep.subr.mxu0 0.0
    %731 = vmatpush1.xpose.msra.mxu0 0.0
    %732 = vmatprep.subr.mxu0 0.0
    %733 = vmatpush1.xpose.msra.mxu0 0.0
    %734 = vmatprep.subr.mxu0 0.0
    %735 = vmatpush1.xpose.msra.mxu0 0.0
    %736 = vmatprep.subr.mxu0 0.0
    %737 = vmatpush1.xpose.msra.mxu0 0.0
    %738 = vmatprep.subr.mxu0 0.0
    %739 = vmatpush1.xpose.msra.mxu0 0.0
    %740 = vmatprep.subr.mxu0 0.0
    %741 = vmatpush1.xpose.msra.mxu0 0.0
    %742 = vmatprep.subr.mxu0 0.0
    %743 = vmatpush1.xpose.msra.mxu0 0.0
    %744 = vmatprep.subr.mxu0 0.0
    %745 = vmatpush1.xpose.msra.mxu0 0.0
    %746 = vmatprep.subr.mxu0 0.0
    %747 = vmatpush1.xpose.msra.mxu0 0.0
    %748 = vmatprep.subr.mxu0 0.0
    %749 = vmatpush1.xpose.msra.mxu0 0.0
    %750 = vmatprep.subr.mxu0 0.0
    %751 = vmatpush1.xpose.msra.mxu0 0.0
    %752 = vmatprep.subr.mxu0 0.0
    %753 = vmatpush1.xpose.msra.mxu0 0.0
    %754 = vmatprep.subr.mxu0 0.0
    %755 = vmatpush1.xpose.msra.mxu0 0.0
    %756 = vmatprep.subr.mxu0 0.0
    %757 = vmatpush1.xpose.msra.mxu0 0.0
    %758 = vmatprep.subr.mxu0 0.0
    %759 = vmatpush1.xpose.msra.mxu0 0.0
    %760 = vmatprep.subr.mxu0 0.0
    %761 = vmatpush1.xpose.msra.mxu0 0.0
    %762 = vmatprep.subr.mxu0 0.0
    %763 = vmatpush1.xpose.msra.mxu0 0.0
    %764 = vmatprep.subr.mxu0 0.0
    %765 = vmatpush1.xpose.msra.mxu0 0.0
    %766 = vmatprep.subr.mxu0 0.0
    %767 = vmatpush1.xpose.msra.mxu0 0.0
    %768 = vmatprep.subr.mxu0 0.0
    %769 = vmatpush1.xpose.msra.mxu0 0.0
    %770 = vmatprep.subr.mxu0 0.0
    %771 = vmatpush1.xpose.msra.mxu0 0.0
    %772 = vmatprep.mubr.f32.mxu0 0.0
    %773 = vmatmul.mubr.f32.gmra.mrb[0].mxu0 %v700
    %v774 = vpop.f32.mrb[0].mxu0
    %v775 = vadd.f32 0.0, %v774
    %v776 = vpop.f32.mrb[0].mxu0
    %777 = vdwg.mxu0
    %v778 = vadd.f32 %v53, %v222
    %v779 = vadd.f32 %v54, %v301
    %v780 = vadd.f32 %v55, %v380
    %v781 = vadd.f32 %v56, %v459
    %v782 = vadd.f32 %v57, %v538
    %v783 = vadd.f32 %v58, %v617
    %v784 = vadd.f32 %v59, %v696
    %v785 = vadd.f32 %v60, %v775
    %vm786 = vcmask 123904
    %787 = vst.msk [vmem:[#allocation2] sm:$0x3] %vm786, %v778
    %788 = vst.msk [vmem:[#allocation2 + $0x2] sm:$0x3] %vm786, %v779
    %789 = vst.msk [vmem:[#allocation2 + $0x4] sm:$0x3] %vm786, %v780
    %790 = vst.msk [vmem:[#allocation2 + $0x6] sm:$0x3] %vm786, %v781
    %791 = vst.msk [vmem:[#allocation2 + $0x8] sm:$0x3] %vm786, %v782
    %792 = vst.msk [vmem:[#allocation2 + $0xa] sm:$0x3] %vm786, %v783
    %793 = vst.msk [vmem:[#allocation2 + $0xc] sm:$0x3] %vm786, %v784
    %794 = vst.msk [vmem:[#allocation2 + $0xe] sm:$0x3] %vm786, %v785
    // Predicated region
    $region22: #{tpu_custom_call.1} parent=1 // pred_check
      %p795 = pneg %p40
    $region23: #{tpu_custom_call.1} parent=1 // pred_check_branch
      %797 = sbr.rel (%p795) target = $region25
    $region24: #{tpu_custom_call.1} parent=1 // pred_region
      %v798 = vld [vmem:[#allocation2] sm:$0x3]
      %v799 = vld [vmem:[#allocation2 + $0x2] sm:$0x3]
      %v800 = vld [vmem:[#allocation2 + $0x4] sm:$0x3]
      %v801 = vld [vmem:[#allocation2 + $0x6] sm:$0x3]
      %v802 = vld [vmem:[#allocation2 + $0x8] sm:$0x3]
      %v803 = vld [vmem:[#allocation2 + $0xa] sm:$0x3]
      %v804 = vld [vmem:[#allocation2 + $0xc] sm:$0x3]
      %v805 = vld [vmem:[#allocation2 + $0xe] sm:$0x3]
      %806 = vst.msk [vmem:[#allocation8] sm:$0x3] %vm786, %v798
      %807 = vst.msk [vmem:[#allocation8 + $0x2] sm:$0x3] %vm786, %v799
      %808 = vst.msk [vmem:[#allocation8 + $0x4] sm:$0x3] %vm786, %v800
      %809 = vst.msk [vmem:[#allocation8 + $0x6] sm:$0x3] %vm786, %v801
      %810 = vst.msk [vmem:[#allocation8 + $0x8] sm:$0x3] %vm786, %v802
      %811 = vst.msk [vmem:[#allocation8 + $0xa] sm:$0x3] %vm786, %v803
      %812 = vst.msk [vmem:[#allocation8 + $0xc] sm:$0x3] %vm786, %v804
      %813 = vst.msk [vmem:[#allocation8 + $0xe] sm:$0x3] %vm786, %v805
    $region25: #{tpu_custom_call.1} parent=1 // pred_fallthru
      _
    // Predicated region
    $region26: #{tpu_custom_call.1} parent=1 // pred_check
      _
    $region27: #{tpu_custom_call.1} parent=1 // pred_check_branch
      %815 = sbr.rel (0) target = $region29
    $region28: #{tpu_custom_call.1} parent=1 // pred_region
      %s817 = ssub.s32 256, 256
      %818 = vsyncadd [#allocation5], %s817
      %s819 = sshll.u32 [#allocation8], 4
      %s820 = int_to_ptr.vmem [resolvable:$true] %s819
      %825 = dma.vmem_to_hbm [thread:$0]  %s820, 256, %s2, [#allocation5], 32, 32, 2
    $region29: #{tpu_custom_call.1} parent=1 // pred_fallthru
      _
    // Predicated region
    $region30: #{tpu_custom_call.1} parent=1 // pred_check
      _
    $region31: #{tpu_custom_call.1} parent=1 // pred_check_branch
      %827 = sbr.rel (0) target = $region33
    $region32: #{tpu_custom_call.1} parent=1 // pred_region
      %828 = dma.done [#allocation5], 256
    $region33: #{tpu_custom_call.1} parent=1 // pred_fallthru
      _
    %829 = vsyncpa [#allocation4], 1
    %830 = vsyncpa [#allocation7], 1
    %831 = vsyncpa [#allocation5], 1

</llo_original>
